<compile_context>
chip_gen: v7x
topology: tpu7x:2x2x1
jax: 0.10.0
libtpu: 0.0.40
codegen_flags: <defaults>
</compile_context>

<pallas_src>
import functools

import jax
import jax.numpy as jnp
from jax.experimental import pallas as pl
from jax.experimental.pallas import tpu as pltpu


def _round_up(v: int, m: int) -> int:
    return ((v + m - 1) // m) * m


def _matmul_bias_kernel(a_ref, b_ref, bias_ref, o_ref, acc_ref):
    """o = a @ b + bias, reduction tiled over grid axis 2."""
    k = pl.program_id(2)

    @pl.when(k == 0)
    def _():
        acc_ref[...] = jnp.zeros_like(acc_ref)

    acc_ref[...] += jnp.dot(
        a_ref[...], b_ref[...], preferred_element_type=jnp.float32
    )

    @pl.when(k == pl.num_programs(2) - 1)
    def _():
        # bias_ref is (1, tn); broadcast add happens once, at finalize only.
        o_ref[...] = (acc_ref[...] + bias_ref[...]).astype(o_ref.dtype)


def _tiled_matmul_bias(a, b, bias, *, tm_pref=256, tn_pref=256, tk_pref=512):
    """Tiled (a @ b + bias) on the MXU with zero-padding to tile multiples."""
    m, k = a.shape
    k2, n = b.shape
    assert k == k2, (a.shape, b.shape)
    dtype = a.dtype

    # Tile sizes: sublane (rows) multiple of 8, lane dims multiple of 128.
    tm = min(tm_pref, _round_up(m, 8))
    tk = min(tk_pref, _round_up(k, 128))
    tn = min(tn_pref, _round_up(n, 128))

    m_pad = _round_up(m, tm)
    k_pad = _round_up(k, tk)
    n_pad = _round_up(n, tn)

    a_p = a if (m_pad == m and k_pad == k) else jnp.pad(
        a, ((0, m_pad - m), (0, k_pad - k)))
    b_p = b if (k_pad == k and n_pad == n) else jnp.pad(
        b, ((0, k_pad - k), (0, n_pad - n)))
    if bias is None:
        bias_p = jnp.zeros((1, n_pad), dtype=dtype)
    else:
        bias_p = jnp.pad(bias.reshape(1, n).astype(dtype),
                         ((0, 0), (0, n_pad - n)))

    grid = (m_pad // tm, n_pad // tn, k_pad // tk)

    cost = pl.CostEstimate(
        flops=2 * m_pad * n_pad * k_pad,
        transcendentals=0,
        bytes_accessed=4 * (m_pad * k_pad + k_pad * n_pad
                            + m_pad * n_pad + n_pad),
    )

    out_p = pl.pallas_call(
        _matmul_bias_kernel,
        out_shape=jax.ShapeDtypeStruct((m_pad, n_pad), dtype),
        grid_spec=pltpu.PrefetchScalarGridSpec(
            num_scalar_prefetch=0,
            grid=grid,
            in_specs=[
                pl.BlockSpec((tm, tk), lambda i, j, kk: (i, kk)),   # A tile
                pl.BlockSpec((tk, tn), lambda i, j, kk: (kk, j)),   # B tile
                pl.BlockSpec((1, tn), lambda i, j, kk: (0, j)),     # bias row
            ],
            out_specs=pl.BlockSpec((tm, tn), lambda i, j, kk: (i, j)),
            scratch_shapes=[pltpu.VMEM((tm, tn), jnp.float32)],
        ),
        compiler_params=pltpu.CompilerParams(
            dimension_semantics=("parallel", "parallel", "arbitrary"),
            vmem_limit_bytes=32 * 1024 * 1024,
        ),
        cost_estimate=cost,
    )(a_p, b_p, bias_p)

    if m_pad != m or n_pad != n:
        out_p = out_p[:m, :n]
    return out_p


@functools.partial(jax.jit, static_argnames=())
def graph_conv_layer(x, adj, weight, bias):
    """x: (N, Fin), adj: (N, N) dense, weight: (Fin, Fout), bias: (Fout,)|None."""
    n, fin = x.shape
    fout = weight.shape[1]
    del n
    if fout <= fin:
        # adj @ (x @ W) + b   — big matmul runs over Fout (the smaller dim).
        xw = _tiled_matmul_bias(x, weight, None)          # (N, Fout)
        out = _tiled_matmul_bias(adj, xw, bias)           # (N, Fout)
    else:
        # (adj @ x) @ W + b   — big matmul runs over Fin (the smaller dim).
        ax = _tiled_matmul_bias(adj, x, None)             # (N, Fin)
        out = _tiled_matmul_bias(ax, weight, bias)        # (N, Fout)
    return out


if __name__ == "__main__":
    # Small synthetic problem: N nodes, in_features -> out_features
    N, IN_F, OUT_F = 16, 8, 32

    key = jax.random.PRNGKey(0)
    kx, kadj, kw, kb = jax.random.split(key, 4)

    # Node features
    x = jax.random.normal(kx, (N, IN_F), dtype=jnp.float32)

    # Symmetric normalized-ish dense adjacency (self loops + random edges)
    a = (jax.random.uniform(kadj, (N, N)) > 0.7).astype(jnp.float32)
    adj = a + a.T + jnp.eye(N, dtype=jnp.float32)
    adj = adj / jnp.sum(adj, axis=1, keepdims=True)

    # Parameter init matching graphConvLayer.initialise():
    #   stdv = weight.size(1) = out_features; uniform(-stdv, stdv)
    stdv = float(OUT_F)
    weight = jax.random.uniform(kw, (IN_F, OUT_F), dtype=jnp.float32,
                                minval=-stdv, maxval=stdv)
    bias = jax.random.uniform(kb, (OUT_F,), dtype=jnp.float32,
                              minval=-stdv, maxval=stdv)

    out = graph_conv_layer(x, adj, weight, bias)
    out = jax.block_until_ready(out)

    # Cross-check against plain JAX reference (module semantics).
    ref = adj @ (x @ weight) + bias
    assert out.shape == (N, OUT_F)
    assert jnp.allclose(out, ref, rtol=1e-4, atol=1e-4), (
        float(jnp.max(jnp.abs(out - ref))))

    print("KERNEL_OK")
</pallas_src>

<mosaic_0001>
module attributes {stable_mosaic.version = 11 : i64} {
  func.func @_matmul_bias_kernel(%arg0: i32, %arg1: i32, %arg2: i32, %arg3: memref<16x128xf32, #tpu.memory_space<vmem>>, %arg4: memref<128x128xf32, #tpu.memory_space<vmem>>, %arg5: memref<1x128xf32, #tpu.memory_space<vmem>>, %arg6: memref<16x128xf32, #tpu.memory_space<vmem>>, %arg7: memref<16x128xf32, #tpu.memory_space<vmem>>) attributes {dimension_semantics = [#tpu.dimension_semantics<parallel>, #tpu.dimension_semantics<parallel>, #tpu.dimension_semantics<arbitrary>], iteration_bounds = array<i64: 1, 1, 1>, scalar_prefetch = 0 : i64, scratch_operands = 1 : i64, tpu.core_type = #tpu.core_type<tc>, window_params = [{transform_indices = @transform_0, window_bounds = array<i64: 16, 128>}, {transform_indices = @transform_1, window_bounds = array<i64: 128, 128>}, {transform_indices = @transform_2, window_bounds = array<i64: 1, 128>}, {transform_indices = @transform_3, window_bounds = array<i64: 16, 128>}]} {
    %c0_i32 = arith.constant 0 : i32
    %0 = arith.cmpi eq, %arg2, %c0_i32 : i32
    %1 = arith.extui %0 : i1 to i32
    %c0_i32_0 = arith.constant 0 : i32
    %2 = arith.cmpi ne, %1, %c0_i32_0 : i32
    scf.if %2 {
      %cst_10 = arith.constant 0.000000e+00 : f32
      %12 = vector.broadcast %cst_10 : f32 to vector<16x128xf32>
      %c0_11 = arith.constant 0 : index
      %c0_12 = arith.constant 0 : index
      %13 = vector.load %arg7[%c0_11, %c0_12] : memref<16x128xf32, #tpu.memory_space<vmem>>, vector<16x128xf32>
      tpu.vector_store %arg7[%c0_11, %c0_12], %12 {strides = array<i32>} : memref<16x128xf32, #tpu.memory_space<vmem>>, vector<16x128xf32>,
    } else {
    }
    %c0 = arith.constant 0 : index
    %c0_1 = arith.constant 0 : index
    %3 = vector.load %arg7[%c0, %c0_1] : memref<16x128xf32, #tpu.memory_space<vmem>>, vector<16x128xf32>
    %c0_2 = arith.constant 0 : index
    %c0_3 = arith.constant 0 : index
    %4 = vector.load %arg3[%c0_2, %c0_3] : memref<16x128xf32, #tpu.memory_space<vmem>>, vector<16x128xf32>
    %c0_4 = arith.constant 0 : index
    %c0_5 = arith.constant 0 : index
    %5 = vector.load %arg4[%c0_4, %c0_5] : memref<128x128xf32, #tpu.memory_space<vmem>>, vector<128x128xf32>
    %cst = arith.constant dense<0.000000e+00> : vector<16x128xf32>
    %6 = tpu.matmul %4, %5, %cst {dimension_numbers = #tpu.dot_dimension_numbers<[1], [0], [0], [1], [0, 0, 1, 1], [], []>} : vector<16x128xf32>, vector<128x128xf32>, vector<16x128xf32> -> vector<16x128xf32>
    %7 = arith.addf %3, %6 : vector<16x128xf32>
    %c0_6 = arith.constant 0 : index
    %c0_7 = arith.constant 0 : index
    %8 = vector.load %arg7[%c0_6, %c0_7] : memref<16x128xf32, #tpu.memory_space<vmem>>, vector<16x128xf32>
    tpu.vector_store %arg7[%c0_6, %c0_7], %7 {strides = array<i32>} : memref<16x128xf32, #tpu.memory_space<vmem>>, vector<16x128xf32>,
    %c0_i32_8 = arith.constant 0 : i32
    %9 = arith.cmpi eq, %arg2, %c0_i32_8 : i32
    %10 = arith.extui %9 : i1 to i32
    %c0_i32_9 = arith.constant 0 : i32
    %11 = arith.cmpi ne, %10, %c0_i32_9 : i32
    scf.if %11 {
      %c0_10 = arith.constant 0 : index
      %c0_11 = arith.constant 0 : index
      %12 = vector.load %arg7[%c0_10, %c0_11] : memref<16x128xf32, #tpu.memory_space<vmem>>, vector<16x128xf32>
      %c0_12 = arith.constant 0 : index
      %c0_13 = arith.constant 0 : index
      %13 = vector.load %arg5[%c0_12, %c0_13] : memref<1x128xf32, #tpu.memory_space<vmem>>, vector<1x128xf32>
      %14 = vector.broadcast %13 : vector<1x128xf32> to vector<16x128xf32>
      %15 = arith.addf %12, %14 : vector<16x128xf32>
      %c0_14 = arith.constant 0 : index
      %c0_15 = arith.constant 0 : index
      %16 = vector.load %arg6[%c0_14, %c0_15] : memref<16x128xf32, #tpu.memory_space<vmem>>, vector<16x128xf32>
      tpu.vector_store %arg6[%c0_14, %c0_15], %15 {strides = array<i32>} : memref<16x128xf32, #tpu.memory_space<vmem>>, vector<16x128xf32>,
    } else {
    }
    return
  }
  func.func @transform_0(%arg0: i32, %arg1: i32, %arg2: i32) -> (i32, i32) {
    %c0_i32 = arith.constant 0 : i32
    return %arg0, %arg2 : i32, i32
  }
  func.func @transform_1(%arg0: i32, %arg1: i32, %arg2: i32) -> (i32, i32) {
    %c0_i32 = arith.constant 0 : i32
    return %arg2, %arg1 : i32, i32
  }
  func.func @transform_2(%arg0: i32, %arg1: i32, %arg2: i32) -> (i32, i32) {
    %c0_i32 = arith.constant 0 : i32
    %c0_i32_0 = arith.constant 0 : i32
    return %c0_i32, %arg1 : i32, i32
  }
  func.func @transform_3(%arg0: i32, %arg1: i32, %arg2: i32) -> (i32, i32) {
    %c0_i32 = arith.constant 0 : i32
    return %arg0, %arg1 : i32, i32
  }
}

module attributes {stable_mosaic.version = 11 : i64} {
  func.func @_matmul_bias_kernel(%arg0: i32, %arg1: i32, %arg2: i32, %arg3: memref<16x128xf32, #tpu.memory_space<vmem>>, %arg4: memref<128x128xf32, #tpu.memory_space<vmem>>, %arg5: memref<1x128xf32, #tpu.memory_space<vmem>>, %arg6: memref<16x128xf32, #tpu.memory_space<vmem>>, %arg7: memref<16x128xf32, #tpu.memory_space<vmem>>) attributes {dimension_semantics = [#tpu.dimension_semantics<parallel>, #tpu.dimension_semantics<parallel>, #tpu.dimension_semantics<arbitrary>], iteration_bounds = array<i64: 1, 1, 1>, scalar_prefetch = 0 : i64, scratch_operands = 1 : i64, tpu.core_type = #tpu.core_type<tc>, window_params = [{transform_indices = @transform_0, window_bounds = array<i64: 16, 128>}, {transform_indices = @transform_1, window_bounds = array<i64: 128, 128>}, {transform_indices = @transform_2, window_bounds = array<i64: 1, 128>}, {transform_indices = @transform_3, window_bounds = array<i64: 16, 128>}]} {
    %c0_i32 = arith.constant 0 : i32
    %0 = arith.cmpi eq, %arg2, %c0_i32 : i32
    %1 = arith.extui %0 : i1 to i32
    %c0_i32_0 = arith.constant 0 : i32
    %2 = arith.cmpi ne, %1, %c0_i32_0 : i32
    scf.if %2 {
      %cst_10 = arith.constant 0.000000e+00 : f32
      %12 = vector.broadcast %cst_10 : f32 to vector<16x128xf32>
      %c0_11 = arith.constant 0 : index
      %c0_12 = arith.constant 0 : index
      %13 = vector.load %arg7[%c0_11, %c0_12] : memref<16x128xf32, #tpu.memory_space<vmem>>, vector<16x128xf32>
      tpu.vector_store %arg7[%c0_11, %c0_12], %12 {strides = array<i32>} : memref<16x128xf32, #tpu.memory_space<vmem>>, vector<16x128xf32>,
    } else {
    }
    %c0 = arith.constant 0 : index
    %c0_1 = arith.constant 0 : index
    %3 = vector.load %arg7[%c0, %c0_1] : memref<16x128xf32, #tpu.memory_space<vmem>>, vector<16x128xf32>
    %c0_2 = arith.constant 0 : index
    %c0_3 = arith.constant 0 : index
    %4 = vector.load %arg3[%c0_2, %c0_3] : memref<16x128xf32, #tpu.memory_space<vmem>>, vector<16x128xf32>
    %c0_4 = arith.constant 0 : index
    %c0_5 = arith.constant 0 : index
    %5 = vector.load %arg4[%c0_4, %c0_5] : memref<128x128xf32, #tpu.memory_space<vmem>>, vector<128x128xf32>
    %cst = arith.constant dense<0.000000e+00> : vector<16x128xf32>
    %6 = tpu.matmul %4, %5, %cst {dimension_numbers = #tpu.dot_dimension_numbers<[1], [0], [0], [1], [0, 0, 1, 1], [], []>} : vector<16x128xf32>, vector<128x128xf32>, vector<16x128xf32> -> vector<16x128xf32>
    %7 = arith.addf %3, %6 : vector<16x128xf32>
    %c0_6 = arith.constant 0 : index
    %c0_7 = arith.constant 0 : index
    %8 = vector.load %arg7[%c0_6, %c0_7] : memref<16x128xf32, #tpu.memory_space<vmem>>, vector<16x128xf32>
    tpu.vector_store %arg7[%c0_6, %c0_7], %7 {strides = array<i32>} : memref<16x128xf32, #tpu.memory_space<vmem>>, vector<16x128xf32>,
    %c0_i32_8 = arith.constant 0 : i32
    %9 = arith.cmpi eq, %arg2, %c0_i32_8 : i32
    %10 = arith.extui %9 : i1 to i32
    %c0_i32_9 = arith.constant 0 : i32
    %11 = arith.cmpi ne, %10, %c0_i32_9 : i32
    scf.if %11 {
      %c0_10 = arith.constant 0 : index
      %c0_11 = arith.constant 0 : index
      %12 = vector.load %arg7[%c0_10, %c0_11] : memref<16x128xf32, #tpu.memory_space<vmem>>, vector<16x128xf32>
      %c0_12 = arith.constant 0 : index
      %c0_13 = arith.constant 0 : index
      %13 = vector.load %arg5[%c0_12, %c0_13] : memref<1x128xf32, #tpu.memory_space<vmem>>, vector<1x128xf32>
      %14 = vector.broadcast %13 : vector<1x128xf32> to vector<16x128xf32>
      %15 = arith.addf %12, %14 : vector<16x128xf32>
      %c0_14 = arith.constant 0 : index
      %c0_15 = arith.constant 0 : index
      %16 = vector.load %arg6[%c0_14, %c0_15] : memref<16x128xf32, #tpu.memory_space<vmem>>, vector<16x128xf32>
      tpu.vector_store %arg6[%c0_14, %c0_15], %15 {strides = array<i32>} : memref<16x128xf32, #tpu.memory_space<vmem>>, vector<16x128xf32>,
    } else {
    }
    return
  }
  func.func @transform_0(%arg0: i32, %arg1: i32, %arg2: i32) -> (i32, i32) {
    %c0_i32 = arith.constant 0 : i32
    return %arg0, %arg2 : i32, i32
  }
  func.func @transform_1(%arg0: i32, %arg1: i32, %arg2: i32) -> (i32, i32) {
    %c0_i32 = arith.constant 0 : i32
    return %arg2, %arg1 : i32, i32
  }
  func.func @transform_2(%arg0: i32, %arg1: i32, %arg2: i32) -> (i32, i32) {
    %c0_i32 = arith.constant 0 : i32
    %c0_i32_0 = arith.constant 0 : i32
    return %c0_i32, %arg1 : i32, i32
  }
  func.func @transform_3(%arg0: i32, %arg1: i32, %arg2: i32) -> (i32, i32) {
    %c0_i32 = arith.constant 0 : i32
    return %arg0, %arg1 : i32, i32
  }
}

</mosaic_0001>

<llo_original>
// kernel: graph_conv_layer.2
$region0: #{graph_conv_layer.2}
  #allocation0 [shape = 'u32[]', space=smem, size = 0x4, offset = 0x4, fixed_abs, tag = 'smem constant byte address 0x4 - core index']
  #allocation1 [shape = 'u32[144,128]{1,0:T(1,128)}', space=vmem, size = 0x12000, scoped, tag = 'internal scratch']
  #allocation2 [shape = 'f32[16,128]{1,0:T(8,128)}', space=vmem, size = 0x2000, scoped, tag = 'scratch operand']
  %s0 = inlined_call_operand.vmem [shape: f32[16,128], index: 0, kind: input, shape index: {}]
  %s1 = inlined_call_operand.vmem [shape: f32[128,128], index: 1, kind: input, shape index: {}]
  %s2 = inlined_call_operand.vmem [shape: f32[1,128], index: 2, kind: input, shape index: {}]
  %s3 = inlined_call_operand.vmem [shape: f32[16,128], index: 3, kind: output, shape index: {}]
  %s4 = sld [smem:[#allocation0]]
  $region30: #{graph_conv_layer.2} parent=0
    _
  %s6 = ssub.s32 1, %s4
  %s7 = scalar_select 0, %s6, %s4
  // Predicated region
  $region2: #{graph_conv_layer.2} parent=0 // pred_check
    _
  $region3: #{graph_conv_layer.2} parent=0 // pred_check_branch
    %9 = sbr.rel (0) target = $region5
  $region4: #{graph_conv_layer.2} parent=0 // pred_region
    _
  $region5: #{graph_conv_layer.2} parent=0 // pred_fallthru
    _
  // Predicated region
  $region6: #{graph_conv_layer.2} parent=0 // pred_check
    _
  $region7: #{graph_conv_layer.2} parent=0 // pred_check_branch
    %11 = sbr.rel (0) target = $region9
  $region8: #{graph_conv_layer.2} parent=0 // pred_region
    _
  $region9: #{graph_conv_layer.2} parent=0 // pred_fallthru
    _
  // Predicated region
  $region10: #{graph_conv_layer.2} parent=0 // pred_check
    _
  $region11: #{graph_conv_layer.2} parent=0 // pred_check_branch
    %13 = sbr.rel (0) target = $region13
  $region12: #{graph_conv_layer.2} parent=0 // pred_region
    _
  $region13: #{graph_conv_layer.2} parent=0 // pred_fallthru
    _
  %p14 = scmp.eq.s32.totalorder 0, 0
  // Predicated region
  $region14: #{graph_conv_layer.2} parent=0 // pred_check
    %p15 = pneg %p14
  $region15: #{graph_conv_layer.2} parent=0 // pred_check_branch
    %17 = sbr.rel (%p15) target = $region17
  $region16: #{graph_conv_layer.2} parent=0 // pred_region
    %18 = vst [vmem:[#allocation2] sm:$0xff] 0.0
    %19 = vst [vmem:[#allocation2 + $0x8] sm:$0xff] 0.0
  $region17: #{graph_conv_layer.2} parent=0 // pred_fallthru
    _
  %v20 = vld [vmem:[#allocation2] sm:$0xff]
  %v21 = vld [vmem:[#allocation2 + $0x8] sm:$0xff]
  %v22 = vld [vmem:[%s0] sm:$0xff]
  %v23 = vld [vmem:[%s0 + $0x8] sm:$0xff]
  %v24 = vld [vmem:[%s1] sm:$0xff]
  %v25 = vld [vmem:[%s1 + $0x8] sm:$0xff]
  %v26 = vld [vmem:[%s1 + $0x10] sm:$0xff]
  %v27 = vld [vmem:[%s1 + $0x18] sm:$0xff]
  %v28 = vld [vmem:[%s1 + $0x20] sm:$0xff]
  %v29 = vld [vmem:[%s1 + $0x28] sm:$0xff]
  %v30 = vld [vmem:[%s1 + $0x30] sm:$0xff]
  %v31 = vld [vmem:[%s1 + $0x38] sm:$0xff]
  %v32 = vld [vmem:[%s1 + $0x40] sm:$0xff]
  %v33 = vld [vmem:[%s1 + $0x48] sm:$0xff]
  %v34 = vld [vmem:[%s1 + $0x50] sm:$0xff]
  %v35 = vld [vmem:[%s1 + $0x58] sm:$0xff]
  %v36 = vld [vmem:[%s1 + $0x60] sm:$0xff]
  %v37 = vld [vmem:[%s1 + $0x68] sm:$0xff]
  %v38 = vld [vmem:[%s1 + $0x70] sm:$0xff]
  %v39 = vld [vmem:[%s1 + $0x78] sm:$0xff]
  %40 = vmatprep.subr.mxu0 0.0
  %41 = vmatpush1.msra.mxu0 %v24
  %42 = vmatprep.subr.mxu0 0.0
  %43 = vmatpush1.msra.mxu0 %v25
  %44 = vmatprep.subr.mxu0 0.0
  %45 = vmatpush1.msra.mxu0 %v26
  %46 = vmatprep.subr.mxu0 0.0
  %47 = vmatpush1.msra.mxu0 %v27
  %48 = vmatprep.subr.mxu0 0.0
  %49 = vmatpush1.msra.mxu0 %v28
  %50 = vmatprep.subr.mxu0 0.0
  %51 = vmatpush1.msra.mxu0 %v29
  %52 = vmatprep.subr.mxu0 0.0
  %53 = vmatpush1.msra.mxu0 %v30
  %54 = vmatprep.subr.mxu0 0.0
  %55 = vmatpush1.msra.mxu0 %v31
  %56 = vmatprep.subr.mxu0 0.0
  %57 = vmatpush1.msra.mxu0 %v32
  %58 = vmatprep.subr.mxu0 0.0
  %59 = vmatpush1.msra.mxu0 %v33
  %60 = vmatprep.subr.mxu0 0.0
  %61 = vmatpush1.msra.mxu0 %v34
  %62 = vmatprep.subr.mxu0 0.0
  %63 = vmatpush1.msra.mxu0 %v35
  %64 = vmatprep.subr.mxu0 0.0
  %65 = vmatpush1.msra.mxu0 %v36
  %66 = vmatprep.subr.mxu0 0.0
  %67 = vmatpush1.msra.mxu0 %v37
  %68 = vmatprep.subr.mxu0 0.0
  %69 = vmatpush1.msra.mxu0 %v38
  %70 = vmatprep.subr.mxu0 0.0
  %71 = vmatpush1.msra.mxu0 %v39
  %72 = vmatprep.subr.mxu0 0.0
  %73 = vmatpush1.msra.mxu0 0.0
  %74 = vmatprep.subr.mxu0 0.0
  %75 = vmatpush1.msra.mxu0 0.0
  %76 = vmatprep.subr.mxu0 0.0
  %77 = vmatpush1.msra.mxu0 0.0
  %78 = vmatprep.subr.mxu0 0.0
  %79 = vmatpush1.msra.mxu0 0.0
  %80 = vmatprep.subr.mxu0 0.0
  %81 = vmatpush1.msra.mxu0 0.0
  %82 = vmatprep.subr.mxu0 0.0
  %83 = vmatpush1.msra.mxu0 0.0
  %84 = vmatprep.subr.mxu0 0.0
  %85 = vmatpush1.msra.mxu0 0.0
  %86 = vmatprep.subr.mxu0 0.0
  %87 = vmatpush1.msra.mxu0 0.0
  %88 = vmatprep.subr.mxu0 0.0
  %89 = vmatpush1.msra.mxu0 0.0
  %90 = vmatprep.subr.mxu0 0.0
  %91 = vmatpush1.msra.mxu0 0.0
  %92 = vmatprep.subr.mxu0 0.0
  %93 = vmatpush1.msra.mxu0 0.0
  %94 = vmatprep.subr.mxu0 0.0
  %95 = vmatpush1.msra.mxu0 0.0
  %96 = vmatprep.subr.mxu0 0.0
  %97 = vmatpush1.msra.mxu0 0.0
  %98 = vmatprep.subr.mxu0 0.0
  %99 = vmatpush1.msra.mxu0 0.0
  %100 = vmatprep.subr.mxu0 0.0
  %101 = vmatpush1.msra.mxu0 0.0
  %102 = vmatprep.subr.mxu0 0.0
  %103 = vmatpush1.msra.mxu0 0.0
  %104 = vmatprep.mubr.f32.mxu0 0.0
  %105 = vmatmul.mubr.f32.gmra.mrb[0].mxu0 %v22
  %v106 = vpop.f32.mrb[0].mxu0
  %v107 = vadd.f32 0.0, %v106
  %v108 = vpop.f32.mrb[0].mxu0
  %109 = vmatprep.mubr.f32.mxu0 0.0
  %110 = vmatmul.mubr.f32.gmra.mrb[0].mxu0 %v23
  %v111 = vpop.f32.mrb[0].mxu0
  %v112 = vadd.f32 0.0, %v111
  %v113 = vpop.f32.mrb[0].mxu0
  %114 = vdwg.mxu0
  %v115 = vadd.f32 %v20, %v107
  %v116 = vadd.f32 %v21, %v112
  %117 = vst [vmem:[#allocation2] sm:$0xff] %v115
  %118 = vst [vmem:[#allocation2 + $0x8] sm:$0xff] %v116
  // Predicated region
  $region18: #{graph_conv_layer.2} parent=0 // pred_check
    %p119 = pneg %p14
  $region19: #{graph_conv_layer.2} parent=0 // pred_check_branch
    %121 = sbr.rel (%p119) target = $region21
  $region20: #{graph_conv_layer.2} parent=0 // pred_region
    %v122 = vld [vmem:[#allocation2] sm:$0xff]
    %v123 = vld [vmem:[#allocation2 + $0x8] sm:$0xff]
    %v124 = vld [vmem:[%s2] sm:$0x1]
    %v126 = vlaneseq
    %v127 = vshrl.u32 %v126, 7
    %v128 = vsub.s32 0, %v127
    %v129 = vrot.slane %v124, %v128
    %v131 = vadd.f32 %v122, %v129
    %v132 = vadd.f32 %v123, %v129
    %133 = vst [vmem:[%s3] sm:$0xff] %v131
    %134 = vst [vmem:[%s3 + $0x8] sm:$0xff] %v132
  $region21: #{graph_conv_layer.2} parent=0 // pred_fallthru
    _
  // Predicated region
  $region22: #{graph_conv_layer.2} parent=0 // pred_check
    _
  $region23: #{graph_conv_layer.2} parent=0 // pred_check_branch
    %136 = sbr.rel (0) target = $region25
  $region24: #{graph_conv_layer.2} parent=0 // pred_region
    _
  $region25: #{graph_conv_layer.2} parent=0 // pred_fallthru
    _
  // Predicated region
  $region26: #{graph_conv_layer.2} parent=0 // pred_check
    _
  $region27: #{graph_conv_layer.2} parent=0 // pred_check_branch
    %138 = sbr.rel (0) target = $region29
  $region28: #{graph_conv_layer.2} parent=0 // pred_region
    _
  $region29: #{graph_conv_layer.2} parent=0 // pred_fallthru
    _

// kernel: graph_conv_layer.3
$region0: #{graph_conv_layer.3}
  #allocation0 [shape = 'u32[]', space=smem, size = 0x4, offset = 0x4, fixed_abs, tag = 'smem constant byte address 0x4 - core index']
  #allocation1 [shape = 'u32[144,128]{1,0:T(1,128)}', space=vmem, size = 0x12000, scoped, tag = 'internal scratch']
  #allocation2 [shape = 'f32[16,128]{1,0:T(8,128)}', space=vmem, size = 0x2000, scoped, tag = 'scratch operand']
  %s0 = inlined_call_operand.vmem [shape: f32[16,128], index: 0, kind: input, shape index: {}]
  %s1 = inlined_call_operand.vmem [shape: f32[128,128], index: 1, kind: input, shape index: {}]
  %s2 = inlined_call_operand.vmem [shape: f32[1,128], index: 2, kind: input, shape index: {}]
  %s3 = inlined_call_operand.hbm [shape: f32[16,128], index: 3, kind: output, shape index: {}]
  %s4 = sld [smem:[#allocation0]]
  $region30: #{graph_conv_layer.3} parent=0
    _
  %s6 = ssub.s32 1, %s4
  %s7 = scalar_select 0, %s6, %s4
  $region1: #{graph_conv_layer.3} parent=0
    #allocation3 [shape = 'u8[8192]{0}', space=vmem, size = 0x2000, scoped, tag = 'output window, operand 0, single buffered']
    #allocation4 [shape = 's32[1]{0}', space=sflag, size = 0x4, scoped, tag = 'scoped memory for graph_conv_layer.3']
    %8 = vsyncpa [#allocation4], 0
    // Predicated region
    $region2: #{graph_conv_layer.3} parent=1 // pred_check
      _
    $region3: #{graph_conv_layer.3} parent=1 // pred_check_branch
      %10 = sbr.rel (0) target = $region5
    $region4: #{graph_conv_layer.3} parent=1 // pred_region
      _
    $region5: #{graph_conv_layer.3} parent=1 // pred_fallthru
      _
    // Predicated region
    $region6: #{graph_conv_layer.3} parent=1 // pred_check
      _
    $region7: #{graph_conv_layer.3} parent=1 // pred_check_branch
      %12 = sbr.rel (0) target = $region9
    $region8: #{graph_conv_layer.3} parent=1 // pred_region
      _
    $region9: #{graph_conv_layer.3} parent=1 // pred_fallthru
      _
    // Predicated region
    $region10: #{graph_conv_layer.3} parent=1 // pred_check
      _
    $region11: #{graph_conv_layer.3} parent=1 // pred_check_branch
      %14 = sbr.rel (0) target = $region13
    $region12: #{graph_conv_layer.3} parent=1 // pred_region
      _
    $region13: #{graph_conv_layer.3} parent=1 // pred_fallthru
      _
    %p15 = scmp.eq.s32.totalorder 0, 0
    // Predicated region
    $region14: #{graph_conv_layer.3} parent=1 // pred_check
      %p16 = pneg %p15
    $region15: #{graph_conv_layer.3} parent=1 // pred_check_branch
      %18 = sbr.rel (%p16) target = $region17
    $region16: #{graph_conv_layer.3} parent=1 // pred_region
      %19 = vst [vmem:[#allocation2] sm:$0xff] 0.0
      %20 = vst [vmem:[#allocation2 + $0x8] sm:$0xff] 0.0
    $region17: #{graph_conv_layer.3} parent=1 // pred_fallthru
      _
    %v21 = vld [vmem:[#allocation2] sm:$0xff]
    %v22 = vld [vmem:[#allocation2 + $0x8] sm:$0xff]
    %v23 = vld [vmem:[%s0] sm:$0xff]
    %v24 = vld [vmem:[%s0 + $0x8] sm:$0xff]
    %v25 = vld [vmem:[%s1] sm:$0xff]
    %v26 = vld [vmem:[%s1 + $0x8] sm:$0xff]
    %v27 = vld [vmem:[%s1 + $0x10] sm:$0xff]
    %v28 = vld [vmem:[%s1 + $0x18] sm:$0xff]
    %v29 = vld [vmem:[%s1 + $0x20] sm:$0xff]
    %v30 = vld [vmem:[%s1 + $0x28] sm:$0xff]
    %v31 = vld [vmem:[%s1 + $0x30] sm:$0xff]
    %v32 = vld [vmem:[%s1 + $0x38] sm:$0xff]
    %v33 = vld [vmem:[%s1 + $0x40] sm:$0xff]
    %v34 = vld [vmem:[%s1 + $0x48] sm:$0xff]
    %v35 = vld [vmem:[%s1 + $0x50] sm:$0xff]
    %v36 = vld [vmem:[%s1 + $0x58] sm:$0xff]
    %v37 = vld [vmem:[%s1 + $0x60] sm:$0xff]
    %v38 = vld [vmem:[%s1 + $0x68] sm:$0xff]
    %v39 = vld [vmem:[%s1 + $0x70] sm:$0xff]
    %v40 = vld [vmem:[%s1 + $0x78] sm:$0xff]
    %41 = vmatprep.subr.mxu0 0.0
    %42 = vmatpush1.msra.mxu0 %v25
    %43 = vmatprep.subr.mxu0 0.0
    %44 = vmatpush1.msra.mxu0 %v26
    %45 = vmatprep.subr.mxu0 0.0
    %46 = vmatpush1.msra.mxu0 %v27
    %47 = vmatprep.subr.mxu0 0.0
    %48 = vmatpush1.msra.mxu0 %v28
    %49 = vmatprep.subr.mxu0 0.0
    %50 = vmatpush1.msra.mxu0 %v29
    %51 = vmatprep.subr.mxu0 0.0
    %52 = vmatpush1.msra.mxu0 %v30
    %53 = vmatprep.subr.mxu0 0.0
    %54 = vmatpush1.msra.mxu0 %v31
    %55 = vmatprep.subr.mxu0 0.0
    %56 = vmatpush1.msra.mxu0 %v32
    %57 = vmatprep.subr.mxu0 0.0
    %58 = vmatpush1.msra.mxu0 %v33
    %59 = vmatprep.subr.mxu0 0.0
    %60 = vmatpush1.msra.mxu0 %v34
    %61 = vmatprep.subr.mxu0 0.0
    %62 = vmatpush1.msra.mxu0 %v35
    %63 = vmatprep.subr.mxu0 0.0
    %64 = vmatpush1.msra.mxu0 %v36
    %65 = vmatprep.subr.mxu0 0.0
    %66 = vmatpush1.msra.mxu0 %v37
    %67 = vmatprep.subr.mxu0 0.0
    %68 = vmatpush1.msra.mxu0 %v38
    %69 = vmatprep.subr.mxu0 0.0
    %70 = vmatpush1.msra.mxu0 %v39
    %71 = vmatprep.subr.mxu0 0.0
    %72 = vmatpush1.msra.mxu0 %v40
    %73 = vmatprep.subr.mxu0 0.0
    %74 = vmatpush1.msra.mxu0 0.0
    %75 = vmatprep.subr.mxu0 0.0
    %76 = vmatpush1.msra.mxu0 0.0
    %77 = vmatprep.subr.mxu0 0.0
    %78 = vmatpush1.msra.mxu0 0.0
    %79 = vmatprep.subr.mxu0 0.0
    %80 = vmatpush1.msra.mxu0 0.0
    %81 = vmatprep.subr.mxu0 0.0
    %82 = vmatpush1.msra.mxu0 0.0
    %83 = vmatprep.subr.mxu0 0.0
    %84 = vmatpush1.msra.mxu0 0.0
    %85 = vmatprep.subr.mxu0 0.0
    %86 = vmatpush1.msra.mxu0 0.0
    %87 = vmatprep.subr.mxu0 0.0
    %88 = vmatpush1.msra.mxu0 0.0
    %89 = vmatprep.subr.mxu0 0.0
    %90 = vmatpush1.msra.mxu0 0.0
    %91 = vmatprep.subr.mxu0 0.0
    %92 = vmatpush1.msra.mxu0 0.0
    %93 = vmatprep.subr.mxu0 0.0
    %94 = vmatpush1.msra.mxu0 0.0
    %95 = vmatprep.subr.mxu0 0.0
    %96 = vmatpush1.msra.mxu0 0.0
    %97 = vmatprep.subr.mxu0 0.0
    %98 = vmatpush1.msra.mxu0 0.0
    %99 = vmatprep.subr.mxu0 0.0
    %100 = vmatpush1.msra.mxu0 0.0
    %101 = vmatprep.subr.mxu0 0.0
    %102 = vmatpush1.msra.mxu0 0.0
    %103 = vmatprep.subr.mxu0 0.0
    %104 = vmatpush1.msra.mxu0 0.0
    %105 = vmatprep.mubr.f32.mxu0 0.0
    %106 = vmatmul.mubr.f32.gmra.mrb[0].mxu0 %v23
    %v107 = vpop.f32.mrb[0].mxu0
    %v108 = vadd.f32 0.0, %v107
    %v109 = vpop.f32.mrb[0].mxu0
    %110 = vmatprep.mubr.f32.mxu0 0.0
    %111 = vmatmul.mubr.f32.gmra.mrb[0].mxu0 %v24
    %v112 = vpop.f32.mrb[0].mxu0
    %v113 = vadd.f32 0.0, %v112
    %v114 = vpop.f32.mrb[0].mxu0
    %115 = vdwg.mxu0
    %v116 = vadd.f32 %v21, %v108
    %v117 = vadd.f32 %v22, %v113
    %118 = vst [vmem:[#allocation2] sm:$0xff] %v116
    %119 = vst [vmem:[#allocation2 + $0x8] sm:$0xff] %v117
    // Predicated region
    $region18: #{graph_conv_layer.3} parent=1 // pred_check
      %p120 = pneg %p15
    $region19: #{graph_conv_layer.3} parent=1 // pred_check_branch
      %122 = sbr.rel (%p120) target = $region21
    $region20: #{graph_conv_layer.3} parent=1 // pred_region
      %v123 = vld [vmem:[#allocation2] sm:$0xff]
      %v124 = vld [vmem:[#allocation2 + $0x8] sm:$0xff]
      %v125 = vld [vmem:[%s2] sm:$0x1]
      %v127 = vlaneseq
      %v128 = vshrl.u32 %v127, 7
      %v129 = vsub.s32 0, %v128
      %v130 = vrot.slane %v125, %v129
      %v132 = vadd.f32 %v123, %v130
      %v133 = vadd.f32 %v124, %v130
      %134 = vst [vmem:[#allocation3] sm:$0xff] %v132
      %135 = vst [vmem:[#allocation3 + $0x8] sm:$0xff] %v133
    $region21: #{graph_conv_layer.3} parent=1 // pred_fallthru
      _
    // Predicated region
    $region22: #{graph_conv_layer.3} parent=1 // pred_check
      _
    $region23: #{graph_conv_layer.3} parent=1 // pred_check_branch
      %137 = sbr.rel (0) target = $region25
    $region24: #{graph_conv_layer.3} parent=1 // pred_region
      %s139 = ssub.s32 256, 256
      %140 = vsyncadd [#allocation4], %s139
      %s141 = sshll.u32 [#allocation3], 4
      %s142 = int_to_ptr.vmem [resolvable:$true] %s141
      %147 = dma.vmem_to_hbm [thread:$0]  %s142, 256, %s3, [#allocation4], 128, 128, 8
    $region25: #{graph_conv_layer.3} parent=1 // pred_fallthru
      _
    // Predicated region
    $region26: #{graph_conv_layer.3} parent=1 // pred_check
      _
    $region27: #{graph_conv_layer.3} parent=1 // pred_check_branch
      %149 = sbr.rel (0) target = $region29
    $region28: #{graph_conv_layer.3} parent=1 // pred_region
      %150 = dma.done [#allocation4], 256
    $region29: #{graph_conv_layer.3} parent=1 // pred_fallthru
      _
    %151 = vsyncpa [#allocation4], 1

</llo_original>
